<compile_context>
chip_gen: v7x
topology: tpu7x:2x2x1
jax: 0.10.0
libtpu: 0.0.40
codegen_flags: <defaults>
</compile_context>

<pallas_src>
import jax
import jax.numpy as jnp
from jax.experimental import pallas as pl
from jax.experimental.pallas import tpu as pltpu

NEG_SLOPE = 0.01  # nn.LeakyReLU default


def _leaky(x):
    # max(x, a*x) == LeakyReLU(x) for 0 < a < 1 (2 VALU ops instead of 3).
    return jnp.maximum(x, NEG_SLOPE * x)


def pool1dconv_kernel(x_ref, w0_ref, b0_ref, w1_ref, b1_ref,
                      wf1_ref, bf1_ref, wf2_ref, bf2_ref, out_ref):
    c1 = wf1_ref.shape[0]
    l_out = w1_ref.shape[1] // c1

    # Conv1d(D, C0, 1) over all time steps at once: block-diagonal weight.
    # In-kernel bf16 cast of the f32 input block (review item #1).
    xb = x_ref[...].astype(jnp.bfloat16)                      # (TB, seq*D)
    y1 = jnp.dot(xb, w0_ref[...],
                 preferred_element_type=jnp.float32) + b0_ref[...]
    y1 = _leaky(y1)                                           # (TB, seq*C0) f32

    # Conv1d(C0, C1, K), valid padding, as ONE banded matmul: every output
    # column is a valid (t < l_out) conv output -> no rotation, no masking.
    y2 = jnp.dot(y1.astype(jnp.bfloat16), w1_ref[...],
                 preferred_element_type=jnp.float32) + b1_ref[...]
    y2 = _leaky(y2)                                           # (TB, l_out*C1) f32

    # torch.max(x, 2): running max over the l_out lane slices of width C1.
    m = y2[:, :c1]
    for t in range(1, l_out):
        m = jnp.maximum(m, y2[:, t * c1:(t + 1) * c1])        # (TB, C1) f32

    # MLP head: Linear -> LeakyReLU -> Linear.
    h = _leaky(jnp.dot(m.astype(jnp.bfloat16), wf1_ref[...],
                       preferred_element_type=jnp.float32) + bf1_ref[...])
    out = jnp.dot(h.astype(jnp.bfloat16), wf2_ref[...],
                  preferred_element_type=jnp.float32) + bf2_ref[...]
    out_ref[...] = out.astype(out_ref.dtype)                  # (TB, fc_out)


def _build_structured_weights(params, *, seq_len, kernel_size):
    """Fold the two Conv1d layers into dense structured matmul weights."""
    w0t, b0, w1t, b1, wf1t, bf1, wf2t, bf2 = params
    c0 = w0t.shape[1]
    c1 = w1t.shape[2]
    l_out = seq_len - kernel_size + 1

    # k=1 conv applied to all time steps: block-diagonal (seq*D, seq*C0).
    w0_big = jnp.kron(jnp.eye(seq_len, dtype=w0t.dtype), w0t)

    # K-tap valid conv: banded (seq*C0, l_out*C1) with
    #   band[(t+k)*C0 + c, t*C1 + j] = W1[k, c, j].
    band = jnp.zeros((l_out, seq_len, c0, c1), w1t.dtype)
    t_idx = jnp.arange(l_out)
    for k in range(kernel_size):
        band = band.at[t_idx, t_idx + k].set(w1t[k])
    w1_band = band.transpose(1, 2, 0, 3).reshape(seq_len * c0, l_out * c1)

    b0_t = jnp.tile(b0.reshape(1, c0), (1, seq_len)).astype(jnp.float32)
    b1_t = jnp.tile(b1.reshape(1, c1), (1, l_out)).astype(jnp.float32)

    return (w0_big.astype(jnp.bfloat16), b0_t,
            w1_band.astype(jnp.bfloat16), b1_t,
            wf1t.astype(jnp.bfloat16), bf1.reshape(1, -1).astype(jnp.float32),
            wf2t.astype(jnp.bfloat16), bf2.reshape(1, -1).astype(jnp.float32))


def pool1dconv_forward(x, params, *, input_shape, kernel_size, block_batch=1024):
    seq_len, data_dim = input_shape
    if seq_len < kernel_size:
        raise ValueError("Pool1DConv requires seq_len >= kernel_size "
                         f"(got seq_len={seq_len}, kernel_size={kernel_size}).")
    feat = seq_len * data_dim
    c0 = params[0].shape[1]
    c1 = params[2].shape[2]
    l_out = seq_len - kernel_size + 1

    # Flat 2-D, lane-dense view of the input; dtype left as-is (cast in-kernel).
    x2 = x.reshape(-1, feat)
    batch = x2.shape[0]

    (w0b, b0t, w1b, b1t, wf1b, bf1f, wf2b, bf2f) = _build_structured_weights(
        params, seq_len=seq_len, kernel_size=kernel_size)
    hidden = wf1b.shape[1]
    fc_out = wf2b.shape[1]

    # Batch tile: a single full-extent block when the batch fits (no padding),
    # otherwise a sublane-aligned tile with padding only for the ragged tail.
    if batch <= block_batch:
        tb = batch
    else:
        tb = max(8, (min(block_batch, batch) // 8) * 8)
    n_blocks = pl.cdiv(batch, tb)
    padded = n_blocks * tb
    if padded != batch:
        x2 = jnp.pad(x2, ((0, padded - batch), (0, 0)))

    flops = 2 * padded * (feat * seq_len * c0
                          + (seq_len * c0) * (l_out * c1)
                          + c1 * hidden + hidden * fc_out)
    bytes_accessed = (padded * feat * x2.dtype.itemsize
                      + (w0b.size + w1b.size + wf1b.size + wf2b.size) * 2
                      + (b0t.size + b1t.size + bf1f.size + bf2f.size) * 4
                      + padded * fc_out * 4)

    out = pl.pallas_call(
        pool1dconv_kernel,
        out_shape=jax.ShapeDtypeStruct((padded, fc_out), jnp.float32),
        grid=(n_blocks,),
        in_specs=[
            pl.BlockSpec((tb, feat), lambda b: (b, 0)),
            pl.BlockSpec(w0b.shape, lambda b: (0, 0)),
            pl.BlockSpec(b0t.shape, lambda b: (0, 0)),
            pl.BlockSpec(w1b.shape, lambda b: (0, 0)),
            pl.BlockSpec(b1t.shape, lambda b: (0, 0)),
            pl.BlockSpec(wf1b.shape, lambda b: (0, 0)),
            pl.BlockSpec(bf1f.shape, lambda b: (0, 0)),
            pl.BlockSpec(wf2b.shape, lambda b: (0, 0)),
            pl.BlockSpec(bf2f.shape, lambda b: (0, 0)),
        ],
        out_specs=pl.BlockSpec((tb, fc_out), lambda b: (b, 0)),
        compiler_params=pltpu.CompilerParams(
            dimension_semantics=("parallel",),
            vmem_limit_bytes=32 * 1024 * 1024),
        cost_estimate=pl.CostEstimate(flops=flops, transcendentals=0,
                                      bytes_accessed=bytes_accessed),
    )(x2, w0b, b0t, w1b, b1t, wf1b, bf1f, wf2b, bf2f)
    return out[:batch]


def reference_forward(x, params, *, input_shape, kernel_size):
    # Pure-JAX reference with the PyTorch structure and the same bf16 matmul
    # operands (f32 accumulation), so the comparison isolates kernel layout.
    seq_len, data_dim = input_shape
    x = x.reshape(-1, seq_len, data_dim)
    w0t, b0, w1t, b1, wf1t, bf1, wf2t, bf2 = params
    bf = lambda a: a.astype(jnp.bfloat16)
    y1 = _leaky(jnp.einsum('btd,dc->btc', bf(x), bf(w0t),
                           preferred_element_type=jnp.float32) + b0[None])
    l_out = seq_len - kernel_size + 1
    y1b = bf(y1)
    acc = jnp.zeros((x.shape[0], l_out, w1t.shape[2]), jnp.float32)
    for k in range(kernel_size):
        acc = acc + jnp.einsum('btc,cn->btn', y1b[:, k:k + l_out, :], bf(w1t[k]),
                               preferred_element_type=jnp.float32)
    y2 = _leaky(acc + b1[None])
    m = jnp.max(y2, axis=1)
    h = _leaky(jnp.dot(bf(m), bf(wf1t), preferred_element_type=jnp.float32) + bf1)
    return jnp.dot(bf(h), bf(wf2t), preferred_element_type=jnp.float32) + bf2


if __name__ == "__main__":
    # Module hyper-parameters (small, consistent with Pool1DConv.__init__).
    input_shape = (16, 8)          # (seq_len, data_dim)
    channels = [16, 32]            # Conv1d(8,16,1) -> Conv1d(16,32,3)
    kernel_size = 3
    fc_shape = [32]                # one hidden layer in the MLP head
    fc_output = 8
    batch = 20

    seq_len, data_dim = input_shape
    c0, c1 = channels
    hidden = fc_shape[0]

    # Deterministic synthetic parameters (transposed for (time, channel) matmuls).
    key = jax.random.PRNGKey(0)
    ks = jax.random.split(key, 9)
    w0t = jax.random.normal(ks[0], (data_dim, c0), jnp.float32) * 0.2     # Conv1d k=1 weight^T
    b0 = jax.random.normal(ks[1], (1, c0), jnp.float32) * 0.1
    w1t = jax.random.normal(ks[2], (kernel_size, c0, c1), jnp.float32) * 0.1  # [k, cin, cout]
    b1 = jax.random.normal(ks[3], (1, c1), jnp.float32) * 0.1
    wf1t = jax.random.normal(ks[4], (c1, hidden), jnp.float32) * 0.1
    bf1 = jax.random.normal(ks[5], (1, hidden), jnp.float32) * 0.1
    wf2t = jax.random.normal(ks[6], (hidden, fc_output), jnp.float32) * 0.1
    bf2 = jax.random.normal(ks[7], (1, fc_output), jnp.float32) * 0.1
    params = (w0t, b0, w1t, b1, wf1t, bf1, wf2t, bf2)

    x = jax.random.normal(ks[8], (batch, seq_len, data_dim), jnp.float32)

    # Single-block path (no padding, grid=1).
    out1 = pool1dconv_forward(x, params, input_shape=input_shape,
                              kernel_size=kernel_size)
    # Multi-block path (tb=8 -> pad to 24, grid=3) to exercise the tiling.
    out2 = pool1dconv_forward(x, params, input_shape=input_shape,
                              kernel_size=kernel_size, block_batch=8)
    out1, out2 = jax.block_until_ready((out1, out2))

    ref = reference_forward(x, params, input_shape=input_shape,
                            kernel_size=kernel_size)
    assert out1.shape == (batch, fc_output)
    assert out2.shape == (batch, fc_output)
    assert jnp.max(jnp.abs(out1 - ref)) < 1e-2
    assert jnp.max(jnp.abs(out2 - ref)) < 1e-2

    print("KERNEL_OK")
</pallas_src>

<mosaic_0001>
module attributes {stable_mosaic.version = 11 : i64} {
  func.func @pool1dconv_kernel(%arg0: i32, %arg1: memref<20x128xf32, #tpu.memory_space<vmem>>, %arg2: memref<128x256xbf16, #tpu.memory_space<vmem>>, %arg3: memref<1x256xf32, #tpu.memory_space<vmem>>, %arg4: memref<256x448xbf16, #tpu.memory_space<vmem>>, %arg5: memref<1x448xf32, #tpu.memory_space<vmem>>, %arg6: memref<32x32xbf16, #tpu.memory_space<vmem>>, %arg7: memref<1x32xf32, #tpu.memory_space<vmem>>, %arg8: memref<32x8xbf16, #tpu.memory_space<vmem>>, %arg9: memref<1x8xf32, #tpu.memory_space<vmem>>, %arg10: memref<20x8xf32, #tpu.memory_space<vmem>>) attributes {dimension_semantics = [#tpu.dimension_semantics<parallel>], iteration_bounds = array<i64: 1>, scalar_prefetch = 0 : i64, scratch_operands = 0 : i64, tpu.core_type = #tpu.core_type<tc>, window_params = [{transform_indices = @transform_0, window_bounds = array<i64: 20, 128>}, {pipeline_mode = #tpu.pipeline_mode<synchronous>, transform_indices = @transform_1, window_bounds = array<i64: 128, 256>}, {pipeline_mode = #tpu.pipeline_mode<synchronous>, transform_indices = @transform_2, window_bounds = array<i64: 1, 256>}, {pipeline_mode = #tpu.pipeline_mode<synchronous>, transform_indices = @transform_3, window_bounds = array<i64: 256, 448>}, {pipeline_mode = #tpu.pipeline_mode<synchronous>, transform_indices = @transform_4, window_bounds = array<i64: 1, 448>}, {pipeline_mode = #tpu.pipeline_mode<synchronous>, transform_indices = @transform_5, window_bounds = array<i64: 32, 32>}, {pipeline_mode = #tpu.pipeline_mode<synchronous>, transform_indices = @transform_6, window_bounds = array<i64: 1, 32>}, {pipeline_mode = #tpu.pipeline_mode<synchronous>, transform_indices = @transform_7, window_bounds = array<i64: 32, 8>}, {pipeline_mode = #tpu.pipeline_mode<synchronous>, transform_indices = @transform_8, window_bounds = array<i64: 1, 8>}, {transform_indices = @transform_9, window_bounds = array<i64: 20, 8>}]} {
    %c0 = arith.constant 0 : index
    %c0_0 = arith.constant 0 : index
    %0 = vector.load %arg1[%c0, %c0_0] : memref<20x128xf32, #tpu.memory_space<vmem>>, vector<20x128xf32>
    %1 = arith.truncf %0 : vector<20x128xf32> to vector<20x128xbf16>
    %c0_1 = arith.constant 0 : index
    %c0_2 = arith.constant 0 : index
    %2 = vector.load %arg2[%c0_1, %c0_2] : memref<128x256xbf16, #tpu.memory_space<vmem>>, vector<128x256xbf16>
    %cst = arith.constant dense<0.000000e+00> : vector<20x256xf32>
    %3 = tpu.matmul %1, %2, %cst {dimension_numbers = #tpu.dot_dimension_numbers<[1], [0], [0], [1], [0, 0, 1, 1], [], []>} : vector<20x128xbf16>, vector<128x256xbf16>, vector<20x256xf32> -> vector<20x256xf32>
    %c0_3 = arith.constant 0 : index
    %c0_4 = arith.constant 0 : index
    %4 = vector.load %arg3[%c0_3, %c0_4] : memref<1x256xf32, #tpu.memory_space<vmem>>, vector<1x256xf32>
    %5 = vector.broadcast %4 : vector<1x256xf32> to vector<20x256xf32>
    %6 = arith.addf %3, %5 : vector<20x256xf32>
    %cst_5 = arith.constant 0.00999999977 : f32
    %7 = vector.broadcast %cst_5 : f32 to vector<20x256xf32>
    %8 = arith.mulf %7, %6 : vector<20x256xf32>
    %9 = arith.maximumf %6, %8 : vector<20x256xf32>
    %10 = arith.truncf %9 : vector<20x256xf32> to vector<20x256xbf16>
    %c0_6 = arith.constant 0 : index
    %c0_7 = arith.constant 0 : index
    %11 = vector.load %arg4[%c0_6, %c0_7] : memref<256x448xbf16, #tpu.memory_space<vmem>>, vector<256x448xbf16>
    %cst_8 = arith.constant dense<0.000000e+00> : vector<20x448xf32>
    %12 = tpu.matmul %10, %11, %cst_8 {dimension_numbers = #tpu.dot_dimension_numbers<[1], [0], [0], [1], [0, 0, 1, 1], [], []>} : vector<20x256xbf16>, vector<256x448xbf16>, vector<20x448xf32> -> vector<20x448xf32>
    %c0_9 = arith.constant 0 : index
    %c0_10 = arith.constant 0 : index
    %13 = vector.load %arg5[%c0_9, %c0_10] : memref<1x448xf32, #tpu.memory_space<vmem>>, vector<1x448xf32>
    %14 = vector.broadcast %13 : vector<1x448xf32> to vector<20x448xf32>
    %15 = arith.addf %12, %14 : vector<20x448xf32>
    %cst_11 = arith.constant 0.00999999977 : f32
    %16 = vector.broadcast %cst_11 : f32 to vector<20x448xf32>
    %17 = arith.mulf %16, %15 : vector<20x448xf32>
    %18 = arith.maximumf %15, %17 : vector<20x448xf32>
    %19 = vector.extract_strided_slice %18 {offsets = [0, 0], sizes = [20, 32], strides = [1, 1]} : vector<20x448xf32> to vector<20x32xf32>
    %20 = vector.extract_strided_slice %18 {offsets = [0, 32], sizes = [20, 32], strides = [1, 1]} : vector<20x448xf32> to vector<20x32xf32>
    %21 = arith.maximumf %19, %20 : vector<20x32xf32>
    %22 = vector.extract_strided_slice %18 {offsets = [0, 64], sizes = [20, 32], strides = [1, 1]} : vector<20x448xf32> to vector<20x32xf32>
    %23 = arith.maximumf %21, %22 : vector<20x32xf32>
    %24 = vector.extract_strided_slice %18 {offsets = [0, 96], sizes = [20, 32], strides = [1, 1]} : vector<20x448xf32> to vector<20x32xf32>
    %25 = arith.maximumf %23, %24 : vector<20x32xf32>
    %26 = vector.extract_strided_slice %18 {offsets = [0, 128], sizes = [20, 32], strides = [1, 1]} : vector<20x448xf32> to vector<20x32xf32>
    %27 = arith.maximumf %25, %26 : vector<20x32xf32>
    %28 = vector.extract_strided_slice %18 {offsets = [0, 160], sizes = [20, 32], strides = [1, 1]} : vector<20x448xf32> to vector<20x32xf32>
    %29 = arith.maximumf %27, %28 : vector<20x32xf32>
    %30 = vector.extract_strided_slice %18 {offsets = [0, 192], sizes = [20, 32], strides = [1, 1]} : vector<20x448xf32> to vector<20x32xf32>
    %31 = arith.maximumf %29, %30 : vector<20x32xf32>
    %32 = vector.extract_strided_slice %18 {offsets = [0, 224], sizes = [20, 32], strides = [1, 1]} : vector<20x448xf32> to vector<20x32xf32>
    %33 = arith.maximumf %31, %32 : vector<20x32xf32>
    %34 = vector.extract_strided_slice %18 {offsets = [0, 256], sizes = [20, 32], strides = [1, 1]} : vector<20x448xf32> to vector<20x32xf32>
    %35 = arith.maximumf %33, %34 : vector<20x32xf32>
    %36 = vector.extract_strided_slice %18 {offsets = [0, 288], sizes = [20, 32], strides = [1, 1]} : vector<20x448xf32> to vector<20x32xf32>
    %37 = arith.maximumf %35, %36 : vector<20x32xf32>
    %38 = vector.extract_strided_slice %18 {offsets = [0, 320], sizes = [20, 32], strides = [1, 1]} : vector<20x448xf32> to vector<20x32xf32>
    %39 = arith.maximumf %37, %38 : vector<20x32xf32>
    %40 = vector.extract_strided_slice %18 {offsets = [0, 352], sizes = [20, 32], strides = [1, 1]} : vector<20x448xf32> to vector<20x32xf32>
    %41 = arith.maximumf %39, %40 : vector<20x32xf32>
    %42 = vector.extract_strided_slice %18 {offsets = [0, 384], sizes = [20, 32], strides = [1, 1]} : vector<20x448xf32> to vector<20x32xf32>
    %43 = arith.maximumf %41, %42 : vector<20x32xf32>
    %44 = vector.extract_strided_slice %18 {offsets = [0, 416], sizes = [20, 32], strides = [1, 1]} : vector<20x448xf32> to vector<20x32xf32>
    %45 = arith.maximumf %43, %44 : vector<20x32xf32>
    %46 = arith.truncf %45 : vector<20x32xf32> to vector<20x32xbf16>
    %c0_12 = arith.constant 0 : index
    %c0_13 = arith.constant 0 : index
    %47 = vector.load %arg6[%c0_12, %c0_13] : memref<32x32xbf16, #tpu.memory_space<vmem>>, vector<32x32xbf16>
    %cst_14 = arith.constant dense<0.000000e+00> : vector<20x32xf32>
    %48 = tpu.matmul %46, %47, %cst_14 {dimension_numbers = #tpu.dot_dimension_numbers<[1], [0], [0], [1], [0, 0, 1, 1], [], []>} : vector<20x32xbf16>, vector<32x32xbf16>, vector<20x32xf32> -> vector<20x32xf32>
    %c0_15 = arith.constant 0 : index
    %c0_16 = arith.constant 0 : index
    %49 = vector.load %arg7[%c0_15, %c0_16] : memref<1x32xf32, #tpu.memory_space<vmem>>, vector<1x32xf32>
    %50 = vector.broadcast %49 : vector<1x32xf32> to vector<20x32xf32>
    %51 = arith.addf %48, %50 : vector<20x32xf32>
    %cst_17 = arith.constant 0.00999999977 : f32
    %52 = vector.broadcast %cst_17 : f32 to vector<20x32xf32>
    %53 = arith.mulf %52, %51 : vector<20x32xf32>
    %54 = arith.maximumf %51, %53 : vector<20x32xf32>
    %55 = arith.truncf %54 : vector<20x32xf32> to vector<20x32xbf16>
    %c0_18 = arith.constant 0 : index
    %c0_19 = arith.constant 0 : index
    %56 = vector.load %arg8[%c0_18, %c0_19] : memref<32x8xbf16, #tpu.memory_space<vmem>>, vector<32x8xbf16>
    %cst_20 = arith.constant dense<0.000000e+00> : vector<20x8xf32>
    %57 = tpu.matmul %55, %56, %cst_20 {dimension_numbers = #tpu.dot_dimension_numbers<[1], [0], [0], [1], [0, 0, 1, 1], [], []>} : vector<20x32xbf16>, vector<32x8xbf16>, vector<20x8xf32> -> vector<20x8xf32>
    %c0_21 = arith.constant 0 : index
    %c0_22 = arith.constant 0 : index
    %58 = vector.load %arg9[%c0_21, %c0_22] : memref<1x8xf32, #tpu.memory_space<vmem>>, vector<1x8xf32>
    %59 = vector.broadcast %58 : vector<1x8xf32> to vector<20x8xf32>
    %60 = arith.addf %57, %59 : vector<20x8xf32>
    %c0_23 = arith.constant 0 : index
    %c0_24 = arith.constant 0 : index
    %61 = vector.load %arg10[%c0_23, %c0_24] : memref<20x8xf32, #tpu.memory_space<vmem>>, vector<20x8xf32>
    tpu.vector_store %arg10[%c0_23, %c0_24], %60 {strides = array<i32>} : memref<20x8xf32, #tpu.memory_space<vmem>>, vector<20x8xf32>,
    return
  }
  func.func @transform_0(%arg0: i32) -> (i32, i32) {
    %c0_i32 = arith.constant 0 : i32
    %c0_i32_0 = arith.constant 0 : i32
    return %arg0, %c0_i32 : i32, i32
  }
  func.func @transform_1(%arg0: i32) -> (i32, i32) {
    %c0_i32 = arith.constant 0 : i32
    %c0_i32_0 = arith.constant 0 : i32
    %c0_i32_1 = arith.constant 0 : i32
    return %c0_i32, %c0_i32_0 : i32, i32
  }
  func.func @transform_2(%arg0: i32) -> (i32, i32) {
    %c0_i32 = arith.constant 0 : i32
    %c0_i32_0 = arith.constant 0 : i32
    %c0_i32_1 = arith.constant 0 : i32
    return %c0_i32, %c0_i32_0 : i32, i32
  }
  func.func @transform_3(%arg0: i32) -> (i32, i32) {
    %c0_i32 = arith.constant 0 : i32
    %c0_i32_0 = arith.constant 0 : i32
    %c0_i32_1 = arith.constant 0 : i32
    return %c0_i32, %c0_i32_0 : i32, i32
  }
  func.func @transform_4(%arg0: i32) -> (i32, i32) {
    %c0_i32 = arith.constant 0 : i32
    %c0_i32_0 = arith.constant 0 : i32
    %c0_i32_1 = arith.constant 0 : i32
    return %c0_i32, %c0_i32_0 : i32, i32
  }
  func.func @transform_5(%arg0: i32) -> (i32, i32) {
    %c0_i32 = arith.constant 0 : i32
    %c0_i32_0 = arith.constant 0 : i32
    %c0_i32_1 = arith.constant 0 : i32
    return %c0_i32, %c0_i32_0 : i32, i32
  }
  func.func @transform_6(%arg0: i32) -> (i32, i32) {
    %c0_i32 = arith.constant 0 : i32
    %c0_i32_0 = arith.constant 0 : i32
    %c0_i32_1 = arith.constant 0 : i32
    return %c0_i32, %c0_i32_0 : i32, i32
  }
  func.func @transform_7(%arg0: i32) -> (i32, i32) {
    %c0_i32 = arith.constant 0 : i32
    %c0_i32_0 = arith.constant 0 : i32
    %c0_i32_1 = arith.constant 0 : i32
    return %c0_i32, %c0_i32_0 : i32, i32
  }
  func.func @transform_8(%arg0: i32) -> (i32, i32) {
    %c0_i32 = arith.constant 0 : i32
    %c0_i32_0 = arith.constant 0 : i32
    %c0_i32_1 = arith.constant 0 : i32
    return %c0_i32, %c0_i32_0 : i32, i32
  }
  func.func @transform_9(%arg0: i32) -> (i32, i32) {
    %c0_i32 = arith.constant 0 : i32
    %c0_i32_0 = arith.constant 0 : i32
    return %arg0, %c0_i32 : i32, i32
  }
}

</mosaic_0001>

<llo_original>
// kernel: tpu_custom_call.1
$region0: #{tpu_custom_call.1}
  #allocation0 [shape = 'u32[]', space=smem, size = 0x4, offset = 0x4, fixed_abs, tag = 'smem constant byte address 0x4 - core index']
  #allocation1 [shape = 'u32[144,128]{1,0:T(1,128)}', space=vmem, size = 0x12000, scoped, tag = 'internal scratch']
  %s0 = inlined_call_operand.vmem [shape: f32[20,128], index: 0, kind: input, shape index: {}]
  %s1 = inlined_call_operand.vmem [shape: bf16[128,256], index: 1, kind: input, shape index: {}]
  %s2 = inlined_call_operand.vmem [shape: f32[1,256], index: 2, kind: input, shape index: {}]
  %s3 = inlined_call_operand.vmem [shape: bf16[256,448], index: 3, kind: input, shape index: {}]
  %s4 = inlined_call_operand.vmem [shape: f32[1,448], index: 4, kind: input, shape index: {}]
  %s5 = inlined_call_operand.vmem [shape: bf16[32,32], index: 5, kind: input, shape index: {}]
  %s6 = inlined_call_operand.vmem [shape: f32[1,32], index: 6, kind: input, shape index: {}]
  %s7 = inlined_call_operand.vmem [shape: bf16[32,8], index: 7, kind: input, shape index: {}]
  %s8 = inlined_call_operand.vmem [shape: f32[1,8], index: 8, kind: input, shape index: {}]
  %s9 = inlined_call_operand.vmem [shape: f32[20,8], index: 9, kind: output, shape index: {}]
  %s10 = sld [smem:[#allocation0]]
  $region46: #{tpu_custom_call.1} parent=0
    _
  %s12 = ssub.s32 1, %s10
  %s13 = scalar_select 0, %s12, %s10
  // Predicated region
  $region2: #{tpu_custom_call.1} parent=0 // pred_check
    _
  $region3: #{tpu_custom_call.1} parent=0 // pred_check_branch
    %15 = sbr.rel (0) target = $region5
  $region4: #{tpu_custom_call.1} parent=0 // pred_region
    _
  $region5: #{tpu_custom_call.1} parent=0 // pred_fallthru
    _
  // Predicated region
  $region6: #{tpu_custom_call.1} parent=0 // pred_check
    _
  $region7: #{tpu_custom_call.1} parent=0 // pred_check_branch
    %17 = sbr.rel (0) target = $region9
  $region8: #{tpu_custom_call.1} parent=0 // pred_region
    _
  $region9: #{tpu_custom_call.1} parent=0 // pred_fallthru
    _
  // Predicated region
  $region10: #{tpu_custom_call.1} parent=0 // pred_check
    _
  $region11: #{tpu_custom_call.1} parent=0 // pred_check_branch
    %19 = sbr.rel (0) target = $region13
  $region12: #{tpu_custom_call.1} parent=0 // pred_region
    _
  $region13: #{tpu_custom_call.1} parent=0 // pred_fallthru
    _
  // Predicated region
  $region14: #{tpu_custom_call.1} parent=0 // pred_check
    _
  $region15: #{tpu_custom_call.1} parent=0 // pred_check_branch
    %21 = sbr.rel (0) target = $region17
  $region16: #{tpu_custom_call.1} parent=0 // pred_region
    _
  $region17: #{tpu_custom_call.1} parent=0 // pred_fallthru
    _
  // Predicated region
  $region18: #{tpu_custom_call.1} parent=0 // pred_check
    _
  $region19: #{tpu_custom_call.1} parent=0 // pred_check_branch
    %23 = sbr.rel (0) target = $region21
  $region20: #{tpu_custom_call.1} parent=0 // pred_region
    _
  $region21: #{tpu_custom_call.1} parent=0 // pred_fallthru
    _
  // Predicated region
  $region22: #{tpu_custom_call.1} parent=0 // pred_check
    _
  $region23: #{tpu_custom_call.1} parent=0 // pred_check_branch
    %25 = sbr.rel (0) target = $region25
  $region24: #{tpu_custom_call.1} parent=0 // pred_region
    _
  $region25: #{tpu_custom_call.1} parent=0 // pred_fallthru
    _
  // Predicated region
  $region26: #{tpu_custom_call.1} parent=0 // pred_check
    _
  $region27: #{tpu_custom_call.1} parent=0 // pred_check_branch
    %27 = sbr.rel (0) target = $region29
  $region28: #{tpu_custom_call.1} parent=0 // pred_region
    _
  $region29: #{tpu_custom_call.1} parent=0 // pred_fallthru
    _
  // Predicated region
  $region30: #{tpu_custom_call.1} parent=0 // pred_check
    _
  $region31: #{tpu_custom_call.1} parent=0 // pred_check_branch
    %29 = sbr.rel (0) target = $region33
  $region32: #{tpu_custom_call.1} parent=0 // pred_region
    _
  $region33: #{tpu_custom_call.1} parent=0 // pred_fallthru
    _
  // Predicated region
  $region34: #{tpu_custom_call.1} parent=0 // pred_check
    _
  $region35: #{tpu_custom_call.1} parent=0 // pred_check_branch
    %31 = sbr.rel (0) target = $region37
  $region36: #{tpu_custom_call.1} parent=0 // pred_region
    _
  $region37: #{tpu_custom_call.1} parent=0 // pred_fallthru
    _
  %v33 = vld [vmem:[%s0] sm:$0xff]
  %v34 = vld [vmem:[%s0 + $0x8] sm:$0xff]
  %v35 = vld [vmem:[%s0 + $0x10] sm:$0xf]
  %v36 = vpack.c.bf16 %v34, %v33
  %v37 = vpack.c.bf16 %v35, %v35
  %v38 = vld [vmem:[%s1] sm:$0xff]
  %v39 = vld [vmem:[%s1 + $0x8] sm:$0xff]
  %v40 = vld [vmem:[%s1 + $0x10] sm:$0xff]
  %v41 = vld [vmem:[%s1 + $0x18] sm:$0xff]
  %v42 = vld [vmem:[%s1 + $0x20] sm:$0xff]
  %v43 = vld [vmem:[%s1 + $0x28] sm:$0xff]
  %v44 = vld [vmem:[%s1 + $0x30] sm:$0xff]
  %v45 = vld [vmem:[%s1 + $0x38] sm:$0xff]
  %v46 = vld [vmem:[%s1 + $0x40] sm:$0xff]
  %v47 = vld [vmem:[%s1 + $0x48] sm:$0xff]
  %v48 = vld [vmem:[%s1 + $0x50] sm:$0xff]
  %v49 = vld [vmem:[%s1 + $0x58] sm:$0xff]
  %v50 = vld [vmem:[%s1 + $0x60] sm:$0xff]
  %v51 = vld [vmem:[%s1 + $0x68] sm:$0xff]
  %v52 = vld [vmem:[%s1 + $0x70] sm:$0xff]
  %v53 = vld [vmem:[%s1 + $0x78] sm:$0xff]
  %v54 = vld [vmem:[%s2] sm:$0x3]
  %v56 = vlaneseq
  %v57 = vshrl.u32 %v56, 7
  %v58 = vsub.s32 0, %v57
  %v59 = vrot.slane %v54, %v58
  %v60 = vlaneseq
  %v61 = vshrl.u32 %v60, 7
  %v62 = vsub.s32 1, %v61
  %v63 = vrot.slane %v54, %v62
  %v82 = vunpack.c.l.b16 %v38
  %v83 = vunpack.c.h.b16 %v38
  %v84 = vunpack.c.l.b16 %v39
  %v85 = vunpack.c.h.b16 %v39
  %v86 = vunpack.c.l.b16 %v40
  %v87 = vunpack.c.h.b16 %v40
  %v88 = vunpack.c.l.b16 %v41
  %v89 = vunpack.c.h.b16 %v41
  %v90 = vunpack.c.l.b16 %v42
  %v91 = vunpack.c.h.b16 %v42
  %v92 = vunpack.c.l.b16 %v43
  %v93 = vunpack.c.h.b16 %v43
  %v94 = vunpack.c.l.b16 %v44
  %v95 = vunpack.c.h.b16 %v44
  %v96 = vunpack.c.l.b16 %v45
  %v97 = vunpack.c.h.b16 %v45
  %v98 = vunpack.c.l.b16 %v46
  %v99 = vunpack.c.h.b16 %v46
  %v100 = vunpack.c.l.b16 %v47
  %v101 = vunpack.c.h.b16 %v47
  %v102 = vunpack.c.l.b16 %v48
  %v103 = vunpack.c.h.b16 %v48
  %v104 = vunpack.c.l.b16 %v49
  %v105 = vunpack.c.h.b16 %v49
  %v106 = vunpack.c.l.b16 %v50
  %v107 = vunpack.c.h.b16 %v50
  %v108 = vunpack.c.l.b16 %v51
  %v109 = vunpack.c.h.b16 %v51
  %v110 = vunpack.c.l.b16 %v52
  %v111 = vunpack.c.h.b16 %v52
  %v112 = vunpack.c.l.b16 %v53
  %v113 = vunpack.c.h.b16 %v53
  %v114 = vpack.c.b16 %v84, %v82
  %v115 = vpack.c.b16 %v85, %v83
  %v116 = vpack.c.b16 %v88, %v86
  %v117 = vpack.c.b16 %v89, %v87
  %v118 = vpack.c.b16 %v92, %v90
  %v119 = vpack.c.b16 %v93, %v91
  %v120 = vpack.c.b16 %v96, %v94
  %v121 = vpack.c.b16 %v97, %v95
  %v122 = vpack.c.b16 %v100, %v98
  %v123 = vpack.c.b16 %v101, %v99
  %v124 = vpack.c.b16 %v104, %v102
  %v125 = vpack.c.b16 %v105, %v103
  %v126 = vpack.c.b16 %v108, %v106
  %v127 = vpack.c.b16 %v109, %v107
  %v128 = vpack.c.b16 %v112, %v110
  %v129 = vpack.c.b16 %v113, %v111
  %146 = vmatprep.subr.bf16.mxu0 %v115
  %147 = vmatpush1.bf16.msra.mxu0 %v114
  %148 = vmatprep.subr.bf16.mxu0 %v117
  %149 = vmatpush1.bf16.msra.mxu0 %v116
  %150 = vmatprep.subr.bf16.mxu0 %v119
  %151 = vmatpush1.bf16.msra.mxu0 %v118
  %152 = vmatprep.subr.bf16.mxu0 %v121
  %153 = vmatpush1.bf16.msra.mxu0 %v120
  %154 = vmatprep.subr.bf16.mxu0 %v123
  %155 = vmatpush1.bf16.msra.mxu0 %v122
  %156 = vmatprep.subr.bf16.mxu0 %v125
  %157 = vmatpush1.bf16.msra.mxu0 %v124
  %158 = vmatprep.subr.bf16.mxu0 %v127
  %159 = vmatpush1.bf16.msra.mxu0 %v126
  %160 = vmatprep.subr.bf16.mxu0 %v129
  %161 = vmatpush1.bf16.msra.mxu0 %v128
  %162 = vmatprep.subr.bf16.mxu0 0
  %163 = vmatpush1.bf16.msra.mxu0 0
  %164 = vmatprep.subr.bf16.mxu0 0
  %165 = vmatpush1.bf16.msra.mxu0 0
  %166 = vmatprep.subr.bf16.mxu0 0
  %167 = vmatpush1.bf16.msra.mxu0 0
  %168 = vmatprep.subr.bf16.mxu0 0
  %169 = vmatpush1.bf16.msra.mxu0 0
  %170 = vmatprep.subr.bf16.mxu0 0
  %171 = vmatpush1.bf16.msra.mxu0 0
  %172 = vmatprep.subr.bf16.mxu0 0
  %173 = vmatpush1.bf16.msra.mxu0 0
  %174 = vmatprep.subr.bf16.mxu0 0
  %175 = vmatpush1.bf16.msra.mxu0 0
  %176 = vmatprep.subr.bf16.mxu0 0
  %177 = vmatpush1.bf16.msra.mxu0 0
  %178 = vmatprep.mubr.bf16.mxu0 0
  %179 = vmatmul.mubr.bf16.gmra.mrb[0].mxu0 %v36
  %v180 = vpop.f32.mrb[0].mxu0
  %v181 = vadd.f32 %v59, %v180
  %v182 = vpop.f32.mrb[0].mxu0
  %v183 = vadd.f32 %v63, %v182
  %v184 = vpop.f32.mrb[0].mxu0
  %v185 = vadd.f32 %v59, %v184
  %v186 = vpop.f32.mrb[0].mxu0
  %v187 = vadd.f32 %v63, %v186
  %188 = vmatprep.mubr.bf16.mxu0 0
  %189 = vmatmul.mubr.bf16.gmra.mrb[0].mxu0 %v37
  %v190 = vpop.f32.mrb[0].mxu0
  %v191 = vadd.f32 %v59, %v190
  %v192 = vpop.f32.mrb[0].mxu0
  %v193 = vadd.f32 %v63, %v192
  %v194 = vpop.f32.mrb[0].mxu0
  %v195 = vpop.f32.mrb[0].mxu0
  %196 = vdwg.mxu0
  %v197 = vmul.f32 %v181, 0.01
  %v198 = vmul.f32 %v183, 0.01
  %v199 = vmul.f32 %v185, 0.01
  %v200 = vmul.f32 %v187, 0.01
  %v201 = vmul.f32 %v191, 0.01
  %v202 = vmul.f32 %v193, 0.01
  %v203 = vmax.f32 %v181, %v197
  %v204 = vmax.f32 %v183, %v198
  %v205 = vmax.f32 %v185, %v199
  %v206 = vmax.f32 %v187, %v200
  %v207 = vmax.f32 %v191, %v201
  %v208 = vmax.f32 %v193, %v202
  %v209 = vpack.c.bf16 %v205, %v203
  %v210 = vpack.c.bf16 %v206, %v204
  %v211 = vpack.c.bf16 %v207, %v207
  %v212 = vpack.c.bf16 %v208, %v208
  %v213 = vld [vmem:[%s3] sm:$0xff]
  %v214 = vld [vmem:[%s3 + $0x8] sm:$0xff]
  %v215 = vld [vmem:[%s3 + $0x10] sm:$0xff]
  %v216 = vld [vmem:[%s3 + $0x18] sm:$0xff]
  %v217 = vld [vmem:[%s3 + $0x20] sm:$0xff]
  %v218 = vld [vmem:[%s3 + $0x28] sm:$0xff]
  %v219 = vld [vmem:[%s3 + $0x30] sm:$0xff]
  %v220 = vld [vmem:[%s3 + $0x38] sm:$0xff]
  %v221 = vld [vmem:[%s3 + $0x40] sm:$0xff]
  %v222 = vld [vmem:[%s3 + $0x48] sm:$0xff]
  %v223 = vld [vmem:[%s3 + $0x50] sm:$0xff]
  %v224 = vld [vmem:[%s3 + $0x58] sm:$0xff]
  %v225 = vld [vmem:[%s3 + $0x60] sm:$0xff]
  %v226 = vld [vmem:[%s3 + $0x68] sm:$0xff]
  %v227 = vld [vmem:[%s3 + $0x70] sm:$0xff]
  %v228 = vld [vmem:[%s3 + $0x78] sm:$0xff]
  %v229 = vld [vmem:[%s3 + $0x80] sm:$0xff]
  %v230 = vld [vmem:[%s3 + $0x88] sm:$0xff]
  %v231 = vld [vmem:[%s3 + $0x90] sm:$0xff]
  %v232 = vld [vmem:[%s3 + $0x98] sm:$0xff]
  %v233 = vld [vmem:[%s3 + $0xa0] sm:$0xff]
  %v234 = vld [vmem:[%s3 + $0xa8] sm:$0xff]
  %v235 = vld [vmem:[%s3 + $0xb0] sm:$0xff]
  %v236 = vld [vmem:[%s3 + $0xb8] sm:$0xff]
  %v237 = vld [vmem:[%s3 + $0xc0] sm:$0xff]
  %v238 = vld [vmem:[%s3 + $0xc8] sm:$0xff]
  %v239 = vld [vmem:[%s3 + $0xd0] sm:$0xff]
  %v240 = vld [vmem:[%s3 + $0xd8] sm:$0xff]
  %v241 = vld [vmem:[%s3 + $0xe0] sm:$0xff]
  %v242 = vld [vmem:[%s3 + $0xe8] sm:$0xff]
  %v243 = vld [vmem:[%s3 + $0xf0] sm:$0xff]
  %v244 = vld [vmem:[%s3 + $0xf8] sm:$0xff]
  %v245 = vld [vmem:[%s3 + $0x100] sm:$0xff]
  %v246 = vld [vmem:[%s3 + $0x108] sm:$0xff]
  %v247 = vld [vmem:[%s3 + $0x110] sm:$0xff]
  %v248 = vld [vmem:[%s3 + $0x118] sm:$0xff]
  %v249 = vld [vmem:[%s3 + $0x120] sm:$0xff]
  %v250 = vld [vmem:[%s3 + $0x128] sm:$0xff]
  %v251 = vld [vmem:[%s3 + $0x130] sm:$0xff]
  %v252 = vld [vmem:[%s3 + $0x138] sm:$0xff]
  %v253 = vld [vmem:[%s3 + $0x140] sm:$0xff]
  %v254 = vld [vmem:[%s3 + $0x148] sm:$0xff]
  %v255 = vld [vmem:[%s3 + $0x150] sm:$0xff]
  %v256 = vld [vmem:[%s3 + $0x158] sm:$0xff]
  %v257 = vld [vmem:[%s3 + $0x160] sm:$0xff]
  %v258 = vld [vmem:[%s3 + $0x168] sm:$0xff]
  %v259 = vld [vmem:[%s3 + $0x170] sm:$0xff]
  %v260 = vld [vmem:[%s3 + $0x178] sm:$0xff]
  %v261 = vld [vmem:[%s3 + $0x180] sm:$0xff]
  %v262 = vld [vmem:[%s3 + $0x188] sm:$0xff]
  %v263 = vld [vmem:[%s3 + $0x190] sm:$0xff]
  %v264 = vld [vmem:[%s3 + $0x198] sm:$0xff]
  %v265 = vld [vmem:[%s3 + $0x1a0] sm:$0xff]
  %v266 = vld [vmem:[%s3 + $0x1a8] sm:$0xff]
  %v267 = vld [vmem:[%s3 + $0x1b0] sm:$0xff]
  %v268 = vld [vmem:[%s3 + $0x1b8] sm:$0xff]
  %v269 = vld [vmem:[%s3 + $0x1c0] sm:$0xff]
  %v270 = vld [vmem:[%s3 + $0x1c8] sm:$0xff]
  %v271 = vld [vmem:[%s3 + $0x1d0] sm:$0xff]
  %v272 = vld [vmem:[%s3 + $0x1d8] sm:$0xff]
  %v273 = vld [vmem:[%s3 + $0x1e0] sm:$0xff]
  %v274 = vld [vmem:[%s3 + $0x1e8] sm:$0xff]
  %v275 = vld [vmem:[%s3 + $0x1f0] sm:$0xff]
  %v276 = vld [vmem:[%s3 + $0x1f8] sm:$0xff]
  %v277 = vld [vmem:[%s4] sm:$0xf]
  %v279 = vlaneseq
  %v280 = vshrl.u32 %v279, 7
  %v281 = vsub.s32 0, %v280
  %v282 = vrot.slane %v277, %v281
  %v283 = vlaneseq
  %v284 = vshrl.u32 %v283, 7
  %v285 = vsub.s32 1, %v284
  %v286 = vrot.slane %v277, %v285
  %v287 = vlaneseq
  %v288 = vshrl.u32 %v287, 7
  %v289 = vsub.s32 2, %v288
  %v290 = vrot.slane %v277, %v289
  %v291 = vlaneseq
  %v292 = vshrl.u32 %v291, 7
  %v293 = vsub.s32 3, %v292
  %v294 = vrot.slane %v277, %v293
  %v363 = vunpack.c.l.b16 %v213
  %v364 = vunpack.c.h.b16 %v213
  %v365 = vunpack.c.l.b16 %v214
  %v366 = vunpack.c.h.b16 %v214
  %v367 = vunpack.c.l.b16 %v215
  %v368 = vunpack.c.h.b16 %v215
  %v369 = vunpack.c.l.b16 %v216
  %v370 = vunpack.c.h.b16 %v216
  %v371 = vunpack.c.l.b16 %v217
  %v372 = vunpack.c.h.b16 %v217
  %v373 = vunpack.c.l.b16 %v218
  %v374 = vunpack.c.h.b16 %v218
  %v375 = vunpack.c.l.b16 %v219
  %v376 = vunpack.c.h.b16 %v219
  %v377 = vunpack.c.l.b16 %v220
  %v378 = vunpack.c.h.b16 %v220
  %v379 = vunpack.c.l.b16 %v221
  %v380 = vunpack.c.h.b16 %v221
  %v381 = vunpack.c.l.b16 %v222
  %v382 = vunpack.c.h.b16 %v222
  %v383 = vunpack.c.l.b16 %v223
  %v384 = vunpack.c.h.b16 %v223
  %v385 = vunpack.c.l.b16 %v224
  %v386 = vunpack.c.h.b16 %v224
  %v387 = vunpack.c.l.b16 %v225
  %v388 = vunpack.c.h.b16 %v225
  %v389 = vunpack.c.l.b16 %v226
  %v390 = vunpack.c.h.b16 %v226
  %v391 = vunpack.c.l.b16 %v227
  %v392 = vunpack.c.h.b16 %v227
  %v393 = vunpack.c.l.b16 %v228
  %v394 = vunpack.c.h.b16 %v228
  %v395 = vunpack.c.l.b16 %v229
  %v396 = vunpack.c.h.b16 %v229
  %v397 = vunpack.c.l.b16 %v230
  %v398 = vunpack.c.h.b16 %v230
  %v399 = vunpack.c.l.b16 %v231
  %v400 = vunpack.c.h.b16 %v231
  %v401 = vunpack.c.l.b16 %v232
  %v402 = vunpack.c.h.b16 %v232
  %v403 = vunpack.c.l.b16 %v233
  %v404 = vunpack.c.h.b16 %v233
  %v405 = vunpack.c.l.b16 %v234
  %v406 = vunpack.c.h.b16 %v234
  %v407 = vunpack.c.l.b16 %v235
  %v408 = vunpack.c.h.b16 %v235
  %v409 = vunpack.c.l.b16 %v236
  %v410 = vunpack.c.h.b16 %v236
  %v411 = vunpack.c.l.b16 %v237
  %v412 = vunpack.c.h.b16 %v237
  %v413 = vunpack.c.l.b16 %v238
  %v414 = vunpack.c.h.b16 %v238
  %v415 = vunpack.c.l.b16 %v239
  %v416 = vunpack.c.h.b16 %v239
  %v417 = vunpack.c.l.b16 %v240
  %v418 = vunpack.c.h.b16 %v240
  %v419 = vunpack.c.l.b16 %v241
  %v420 = vunpack.c.h.b16 %v241
  %v421 = vunpack.c.l.b16 %v242
  %v422 = vunpack.c.h.b16 %v242
  %v423 = vunpack.c.l.b16 %v243
  %v424 = vunpack.c.h.b16 %v243
  %v425 = vunpack.c.l.b16 %v244
  %v426 = vunpack.c.h.b16 %v244
  %v427 = vunpack.c.l.b16 %v245
  %v428 = vunpack.c.h.b16 %v245
  %v429 = vunpack.c.l.b16 %v246
  %v430 = vunpack.c.h.b16 %v246
  %v431 = vunpack.c.l.b16 %v247
  %v432 = vunpack.c.h.b16 %v247
  %v433 = vunpack.c.l.b16 %v248
  %v434 = vunpack.c.h.b16 %v248
  %v435 = vunpack.c.l.b16 %v249
  %v436 = vunpack.c.h.b16 %v249
  %v437 = vunpack.c.l.b16 %v250
  %v438 = vunpack.c.h.b16 %v250
  %v439 = vunpack.c.l.b16 %v251
  %v440 = vunpack.c.h.b16 %v251
  %v441 = vunpack.c.l.b16 %v252
  %v442 = vunpack.c.h.b16 %v252
  %v443 = vunpack.c.l.b16 %v253
  %v444 = vunpack.c.h.b16 %v253
  %v445 = vunpack.c.l.b16 %v254
  %v446 = vunpack.c.h.b16 %v254
  %v447 = vunpack.c.l.b16 %v255
  %v448 = vunpack.c.h.b16 %v255
  %v449 = vunpack.c.l.b16 %v256
  %v450 = vunpack.c.h.b16 %v256
  %v451 = vunpack.c.l.b16 %v257
  %v452 = vunpack.c.h.b16 %v257
  %v453 = vunpack.c.l.b16 %v258
  %v454 = vunpack.c.h.b16 %v258
  %v455 = vunpack.c.l.b16 %v259
  %v456 = vunpack.c.h.b16 %v259
  %v457 = vunpack.c.l.b16 %v260
  %v458 = vunpack.c.h.b16 %v260
  %v459 = vunpack.c.l.b16 %v261
  %v460 = vunpack.c.h.b16 %v261
  %v461 = vunpack.c.l.b16 %v262
  %v462 = vunpack.c.h.b16 %v262
  %v463 = vunpack.c.l.b16 %v263
  %v464 = vunpack.c.h.b16 %v263
  %v465 = vunpack.c.l.b16 %v264
  %v466 = vunpack.c.h.b16 %v264
  %v467 = vunpack.c.l.b16 %v265
  %v468 = vunpack.c.h.b16 %v265
  %v469 = vunpack.c.l.b16 %v266
  %v470 = vunpack.c.h.b16 %v266
  %v471 = vunpack.c.l.b16 %v267
  %v472 = vunpack.c.h.b16 %v267
  %v473 = vunpack.c.l.b16 %v268
  %v474 = vunpack.c.h.b16 %v268
  %v475 = vunpack.c.l.b16 %v269
  %v476 = vunpack.c.h.b16 %v269
  %v477 = vunpack.c.l.b16 %v270
  %v478 = vunpack.c.h.b16 %v270
  %v479 = vunpack.c.l.b16 %v271
  %v480 = vunpack.c.h.b16 %v271
  %v481 = vunpack.c.l.b16 %v272
  %v482 = vunpack.c.h.b16 %v272
  %v483 = vunpack.c.l.b16 %v273
  %v484 = vunpack.c.h.b16 %v273
  %v485 = vunpack.c.l.b16 %v274
  %v486 = vunpack.c.h.b16 %v274
  %v487 = vunpack.c.l.b16 %v275
  %v488 = vunpack.c.h.b16 %v275
  %v489 = vunpack.c.l.b16 %v276
  %v490 = vunpack.c.h.b16 %v276
  %v491 = vpack.c.b16 %v367, %v363
  %v492 = vpack.c.b16 %v368, %v364
  %v493 = vpack.c.b16 %v369, %v365
  %v494 = vpack.c.b16 %v370, %v366
  %v495 = vpack.c.b16 %v375, %v371
  %v496 = vpack.c.b16 %v376, %v372
  %v497 = vpack.c.b16 %v377, %v373
  %v498 = vpack.c.b16 %v378, %v374
  %v499 = vpack.c.b16 %v383, %v379
  %v500 = vpack.c.b16 %v384, %v380
  %v501 = vpack.c.b16 %v385, %v381
  %v502 = vpack.c.b16 %v386, %v382
  %v503 = vpack.c.b16 %v391, %v387
  %v504 = vpack.c.b16 %v392, %v388
  %v505 = vpack.c.b16 %v393, %v389
  %v506 = vpack.c.b16 %v394, %v390
  %v507 = vpack.c.b16 %v399, %v395
  %v508 = vpack.c.b16 %v400, %v396
  %v509 = vpack.c.b16 %v401, %v397
  %v510 = vpack.c.b16 %v402, %v398
  %v511 = vpack.c.b16 %v407, %v403
  %v512 = vpack.c.b16 %v408, %v404
  %v513 = vpack.c.b16 %v409, %v405
  %v514 = vpack.c.b16 %v410, %v406
  %v515 = vpack.c.b16 %v415, %v411
  %v516 = vpack.c.b16 %v416, %v412
  %v517 = vpack.c.b16 %v417, %v413
  %v518 = vpack.c.b16 %v418, %v414
  %v519 = vpack.c.b16 %v423, %v419
  %v520 = vpack.c.b16 %v424, %v420
  %v521 = vpack.c.b16 %v425, %v421
  %v522 = vpack.c.b16 %v426, %v422
  %v523 = vpack.c.b16 %v431, %v427
  %v524 = vpack.c.b16 %v432, %v428
  %v525 = vpack.c.b16 %v433, %v429
  %v526 = vpack.c.b16 %v434, %v430
  %v527 = vpack.c.b16 %v439, %v435
  %v528 = vpack.c.b16 %v440, %v436
  %v529 = vpack.c.b16 %v441, %v437
  %v530 = vpack.c.b16 %v442, %v438
  %v531 = vpack.c.b16 %v447, %v443
  %v532 = vpack.c.b16 %v448, %v444
  %v533 = vpack.c.b16 %v449, %v445
  %v534 = vpack.c.b16 %v450, %v446
  %v535 = vpack.c.b16 %v455, %v451
  %v536 = vpack.c.b16 %v456, %v452
  %v537 = vpack.c.b16 %v457, %v453
  %v538 = vpack.c.b16 %v458, %v454
  %v539 = vpack.c.b16 %v463, %v459
  %v540 = vpack.c.b16 %v464, %v460
  %v541 = vpack.c.b16 %v465, %v461
  %v542 = vpack.c.b16 %v466, %v462
  %v543 = vpack.c.b16 %v471, %v467
  %v544 = vpack.c.b16 %v472, %v468
  %v545 = vpack.c.b16 %v473, %v469
  %v546 = vpack.c.b16 %v474, %v470
  %v547 = vpack.c.b16 %v479, %v475
  %v548 = vpack.c.b16 %v480, %v476
  %v549 = vpack.c.b16 %v481, %v477
  %v550 = vpack.c.b16 %v482, %v478
  %v551 = vpack.c.b16 %v487, %v483
  %v552 = vpack.c.b16 %v488, %v484
  %v553 = vpack.c.b16 %v489, %v485
  %v554 = vpack.c.b16 %v490, %v486
  %619 = vmatprep.subr.bf16.mxu0 %v492
  %620 = vmatpush1.bf16.msra.mxu0 %v491
  %621 = vmatprep.subr.bf16.mxu0 %v496
  %622 = vmatpush1.bf16.msra.mxu0 %v495
  %623 = vmatprep.subr.bf16.mxu0 %v500
  %624 = vmatpush1.bf16.msra.mxu0 %v499
  %625 = vmatprep.subr.bf16.mxu0 %v504
  %626 = vmatpush1.bf16.msra.mxu0 %v503
  %627 = vmatprep.subr.bf16.mxu0 %v508
  %628 = vmatpush1.bf16.msra.mxu0 %v507
  %629 = vmatprep.subr.bf16.mxu0 %v512
  %630 = vmatpush1.bf16.msra.mxu0 %v511
  %631 = vmatprep.subr.bf16.mxu0 %v516
  %632 = vmatpush1.bf16.msra.mxu0 %v515
  %633 = vmatprep.subr.bf16.mxu0 %v520
  %634 = vmatpush1.bf16.msra.mxu0 %v519
  %635 = vmatprep.subr.bf16.mxu0 %v524
  %636 = vmatpush1.bf16.msra.mxu0 %v523
  %637 = vmatprep.subr.bf16.mxu0 %v528
  %638 = vmatpush1.bf16.msra.mxu0 %v527
  %639 = vmatprep.subr.bf16.mxu0 %v532
  %640 = vmatpush1.bf16.msra.mxu0 %v531
  %641 = vmatprep.subr.bf16.mxu0 %v536
  %642 = vmatpush1.bf16.msra.mxu0 %v535
  %643 = vmatprep.subr.bf16.mxu0 %v540
  %644 = vmatpush1.bf16.msra.mxu0 %v539
  %645 = vmatprep.subr.bf16.mxu0 %v544
  %646 = vmatpush1.bf16.msra.mxu0 %v543
  %647 = vmatprep.subr.bf16.mxu0 %v548
  %648 = vmatpush1.bf16.msra.mxu0 %v547
  %649 = vmatprep.subr.bf16.mxu0 %v552
  %650 = vmatpush1.bf16.msra.mxu0 %v551
  %651 = vmatprep.mubr.bf16.mxu0 %v210
  %652 = vmatmul.mubr.bf16.gmra.mrb[0].mxu0 %v209
  %v653 = vpop.f32.mrb[0].mxu0
  %v654 = vadd.f32 %v282, %v653
  %v655 = vpop.f32.mrb[0].mxu0
  %v656 = vadd.f32 %v286, %v655
  %v657 = vpop.f32.mrb[0].mxu0
  %v658 = vadd.f32 %v282, %v657
  %v659 = vpop.f32.mrb[0].mxu0
  %v660 = vadd.f32 %v286, %v659
  %661 = vmatprep.mubr.bf16.mxu0 %v212
  %662 = vmatmul.mubr.bf16.gmra.mrb[0].mxu0 %v211
  %v663 = vpop.f32.mrb[0].mxu0
  %v664 = vadd.f32 %v282, %v663
  %v665 = vpop.f32.mrb[0].mxu0
  %v666 = vadd.f32 %v286, %v665
  %v667 = vpop.f32.mrb[0].mxu0
  %v668 = vpop.f32.mrb[0].mxu0
  %669 = vdwg.mxu0
  %670 = vmatprep.subr.bf16.mxu0 %v494
  %671 = vmatpush1.bf16.msra.mxu0 %v493
  %672 = vmatprep.subr.bf16.mxu0 %v498
  %673 = vmatpush1.bf16.msra.mxu0 %v497
  %674 = vmatprep.subr.bf16.mxu0 %v502
  %675 = vmatpush1.bf16.msra.mxu0 %v501
  %676 = vmatprep.subr.bf16.mxu0 %v506
  %677 = vmatpush1.bf16.msra.mxu0 %v505
  %678 = vmatprep.subr.bf16.mxu0 %v510
  %679 = vmatpush1.bf16.msra.mxu0 %v509
  %680 = vmatprep.subr.bf16.mxu0 %v514
  %681 = vmatpush1.bf16.msra.mxu0 %v513
  %682 = vmatprep.subr.bf16.mxu0 %v518
  %683 = vmatpush1.bf16.msra.mxu0 %v517
  %684 = vmatprep.subr.bf16.mxu0 %v522
  %685 = vmatpush1.bf16.msra.mxu0 %v521
  %686 = vmatprep.subr.bf16.mxu0 %v526
  %687 = vmatpush1.bf16.msra.mxu0 %v525
  %688 = vmatprep.subr.bf16.mxu0 %v530
  %689 = vmatpush1.bf16.msra.mxu0 %v529
  %690 = vmatprep.subr.bf16.mxu0 %v534
  %691 = vmatpush1.bf16.msra.mxu0 %v533
  %692 = vmatprep.subr.bf16.mxu0 %v538
  %693 = vmatpush1.bf16.msra.mxu0 %v537
  %694 = vmatprep.subr.bf16.mxu0 %v542
  %695 = vmatpush1.bf16.msra.mxu0 %v541
  %696 = vmatprep.subr.bf16.mxu0 %v546
  %697 = vmatpush1.bf16.msra.mxu0 %v545
  %698 = vmatprep.subr.bf16.mxu0 %v550
  %699 = vmatpush1.bf16.msra.mxu0 %v549
  %700 = vmatprep.subr.bf16.mxu0 %v554
  %701 = vmatpush1.bf16.msra.mxu0 %v553
  %702 = vmatprep.mubr.bf16.mxu0 %v210
  %703 = vmatmul.mubr.bf16.gmra.mrb[0].mxu0 %v209
  %v704 = vpop.f32.mrb[0].mxu0
  %v705 = vadd.f32 %v290, %v704
  %v706 = vpop.f32.mrb[0].mxu0
  %v707 = vadd.f32 %v294, %v706
  %v708 = vpop.f32.mrb[0].mxu0
  %v709 = vadd.f32 %v290, %v708
  %v710 = vpop.f32.mrb[0].mxu0
  %v711 = vadd.f32 %v294, %v710
  %712 = vmatprep.mubr.bf16.mxu0 %v212
  %713 = vmatmul.mubr.bf16.gmra.mrb[0].mxu0 %v211
  %v714 = vpop.f32.mrb[0].mxu0
  %v715 = vadd.f32 %v290, %v714
  %v716 = vpop.f32.mrb[0].mxu0
  %v717 = vadd.f32 %v294, %v716
  %v718 = vpop.f32.mrb[0].mxu0
  %v719 = vpop.f32.mrb[0].mxu0
  %720 = vdwg.mxu0
  %v721 = vmul.f32 %v654, 0.01
  %v722 = vmul.f32 %v656, 0.01
  %v723 = vmul.f32 %v705, 0.01
  %v724 = vmul.f32 %v707, 0.01
  %v725 = vmul.f32 %v658, 0.01
  %v726 = vmul.f32 %v660, 0.01
  %v727 = vmul.f32 %v709, 0.01
  %v728 = vmul.f32 %v711, 0.01
  %v729 = vmul.f32 %v664, 0.01
  %v730 = vmul.f32 %v666, 0.01
  %v731 = vmul.f32 %v715, 0.01
  %v732 = vmul.f32 %v717, 0.01
  %v733 = vmax.f32 %v654, %v721
  %v734 = vmax.f32 %v656, %v722
  %v735 = vmax.f32 %v705, %v723
  %v736 = vmax.f32 %v707, %v724
  %v737 = vmax.f32 %v658, %v725
  %v738 = vmax.f32 %v660, %v726
  %v739 = vmax.f32 %v709, %v727
  %v740 = vmax.f32 %v711, %v728
  %v741 = vmax.f32 %v664, %v729
  %v742 = vmax.f32 %v666, %v730
  %v743 = vmax.f32 %v715, %v731
  %v744 = vmax.f32 %v717, %v732
  %748 = vrot.lane.b32.xlu0 %v733, 96
  %v749 = vpop.permute.xlu0 %748
  %750 = vrot.lane.b32.xlu0 %v737, 96
  %v751 = vpop.permute.xlu0 %750
  %752 = vrot.lane.b32.xlu0 %v741, 96
  %v753 = vpop.permute.xlu0 %752
  %v757 = vmax.f32 %v733, %v749
  %v758 = vmax.f32 %v737, %v751
  %v759 = vmax.f32 %v741, %v753
  %760 = vrot.lane.b32.xlu0 %v733, 64
  %v761 = vpop.permute.xlu0 %760
  %762 = vrot.lane.b32.xlu0 %v737, 64
  %v763 = vpop.permute.xlu0 %762
  %764 = vrot.lane.b32.xlu0 %v741, 64
  %v765 = vpop.permute.xlu0 %764
  %v769 = vmax.f32 %v757, %v761
  %v770 = vmax.f32 %v758, %v763
  %v771 = vmax.f32 %v759, %v765
  %772 = vrot.lane.b32.xlu0 %v733, 32
  %v773 = vpop.permute.xlu0 %772
  %774 = vrot.lane.b32.xlu0 %v737, 32
  %v775 = vpop.permute.xlu0 %774
  %776 = vrot.lane.b32.xlu0 %v741, 32
  %v777 = vpop.permute.xlu0 %776
  %v781 = vmax.f32 %v769, %v773
  %v782 = vmax.f32 %v770, %v775
  %v783 = vmax.f32 %v771, %v777
  %v784 = vmax.f32 %v781, %v734
  %v785 = vmax.f32 %v782, %v738
  %v786 = vmax.f32 %v783, %v742
  %790 = vrot.lane.b32.xlu0 %v734, 96
  %v791 = vpop.permute.xlu0 %790
  %792 = vrot.lane.b32.xlu0 %v738, 96
  %v793 = vpop.permute.xlu0 %792
  %794 = vrot.lane.b32.xlu0 %v742, 96
  %v795 = vpop.permute.xlu0 %794
  %v799 = vmax.f32 %v784, %v791
  %v800 = vmax.f32 %v785, %v793
  %v801 = vmax.f32 %v786, %v795
  %802 = vrot.lane.b32.xlu0 %v734, 64
  %v803 = vpop.permute.xlu0 %802
  %804 = vrot.lane.b32.xlu0 %v738, 64
  %v805 = vpop.permute.xlu0 %804
  %806 = vrot.lane.b32.xlu0 %v742, 64
  %v807 = vpop.permute.xlu0 %806
  %v811 = vmax.f32 %v799, %v803
  %v812 = vmax.f32 %v800, %v805
  %v813 = vmax.f32 %v801, %v807
  %814 = vrot.lane.b32.xlu0 %v734, 32
  %v815 = vpop.permute.xlu0 %814
  %816 = vrot.lane.b32.xlu0 %v738, 32
  %v817 = vpop.permute.xlu0 %816
  %818 = vrot.lane.b32.xlu0 %v742, 32
  %v819 = vpop.permute.xlu0 %818
  %v823 = vmax.f32 %v811, %v815
  %v824 = vmax.f32 %v812, %v817
  %v825 = vmax.f32 %v813, %v819
  %v826 = vmax.f32 %v823, %v735
  %v827 = vmax.f32 %v824, %v739
  %v828 = vmax.f32 %v825, %v743
  %832 = vrot.lane.b32.xlu0 %v735, 96
  %v833 = vpop.permute.xlu0 %832
  %834 = vrot.lane.b32.xlu0 %v739, 96
  %v835 = vpop.permute.xlu0 %834
  %836 = vrot.lane.b32.xlu0 %v743, 96
  %v837 = vpop.permute.xlu0 %836
  %v841 = vmax.f32 %v826, %v833
  %v842 = vmax.f32 %v827, %v835
  %v843 = vmax.f32 %v828, %v837
  %844 = vrot.lane.b32.xlu0 %v735, 64
  %v845 = vpop.permute.xlu0 %844
  %846 = vrot.lane.b32.xlu0 %v739, 64
  %v847 = vpop.permute.xlu0 %846
  %848 = vrot.lane.b32.xlu0 %v743, 64
  %v849 = vpop.permute.xlu0 %848
  %v853 = vmax.f32 %v841, %v845
  %v854 = vmax.f32 %v842, %v847
  %v855 = vmax.f32 %v843, %v849
  %856 = vrot.lane.b32.xlu0 %v735, 32
  %v857 = vpop.permute.xlu0 %856
  %858 = vrot.lane.b32.xlu0 %v739, 32
  %v859 = vpop.permute.xlu0 %858
  %860 = vrot.lane.b32.xlu0 %v743, 32
  %v861 = vpop.permute.xlu0 %860
  %v865 = vmax.f32 %v853, %v857
  %v866 = vmax.f32 %v854, %v859
  %v867 = vmax.f32 %v855, %v861
  %v868 = vmax.f32 %v865, %v736
  %v869 = vmax.f32 %v866, %v740
  %v870 = vmax.f32 %v867, %v744
  %874 = vrot.lane.b32.xlu0 %v736, 96
  %v875 = vpop.permute.xlu0 %874
  %876 = vrot.lane.b32.xlu0 %v740, 96
  %v877 = vpop.permute.xlu0 %876
  %878 = vrot.lane.b32.xlu0 %v744, 96
  %v879 = vpop.permute.xlu0 %878
  %v883 = vmax.f32 %v868, %v875
  %v884 = vmax.f32 %v869, %v877
  %v885 = vmax.f32 %v870, %v879
  %v886 = vpack.c.bf16 %v884, %v883
  %v887 = vpack.c.bf16 %v885, %v885
  %v888 = vld [vmem:[%s5] sm:$0xf]
  %v889 = vld [vmem:[%s5 + $0x4] sm:$0xf]
  %v890 = vld [vmem:[%s5 + $0x8] sm:$0xf]
  %v891 = vld [vmem:[%s5 + $0xc] sm:$0xf]
  %v892 = vld [vmem:[%s6] sm:$0x1]
  %v894 = vlaneseq
  %v895 = vshrl.u32 %v894, 7
  %v896 = vsub.s32 0, %v895
  %v897 = vrot.slane %v892, %v896
  %v903 = vunpack.c.l.b16 %v888
  %v904 = vunpack.c.l.b16 %v889
  %v905 = vunpack.c.l.b16 %v890
  %v906 = vunpack.c.l.b16 %v891
  %v907 = vpack.c.b16 %v904, %v903
  %v908 = vpack.c.b16 %v906, %v905
  %vm911 = vcmask 261120
  %v913 = vsel %vm911, %v886, 0
  %v916 = vsel %vm911, %v887, 0
  %918 = vmatprep.subr.bf16.mxu0 0
  %919 = vmatpush1.bf16.msra.mxu0 %v907
  %920 = vmatprep.subr.bf16.mxu0 0
  %921 = vmatpush1.bf16.msra.mxu0 %v908
  %922 = vmatprep.subr.bf16.mxu0 0
  %923 = vmatpush1.bf16.msra.mxu0 0
  %924 = vmatprep.subr.bf16.mxu0 0
  %925 = vmatpush1.bf16.msra.mxu0 0
  %926 = vmatprep.subr.bf16.mxu0 0
  %927 = vmatpush1.bf16.msra.mxu0 0
  %928 = vmatprep.subr.bf16.mxu0 0
  %929 = vmatpush1.bf16.msra.mxu0 0
  %930 = vmatprep.subr.bf16.mxu0 0
  %931 = vmatpush1.bf16.msra.mxu0 0
  %932 = vmatprep.subr.bf16.mxu0 0
  %933 = vmatpush1.bf16.msra.mxu0 0
  %934 = vmatprep.subr.bf16.mxu0 0
  %935 = vmatpush1.bf16.msra.mxu0 0
  %936 = vmatprep.subr.bf16.mxu0 0
  %937 = vmatpush1.bf16.msra.mxu0 0
  %938 = vmatprep.subr.bf16.mxu0 0
  %939 = vmatpush1.bf16.msra.mxu0 0
  %940 = vmatprep.subr.bf16.mxu0 0
  %941 = vmatpush1.bf16.msra.mxu0 0
  %942 = vmatprep.subr.bf16.mxu0 0
  %943 = vmatpush1.bf16.msra.mxu0 0
  %944 = vmatprep.subr.bf16.mxu0 0
  %945 = vmatpush1.bf16.msra.mxu0 0
  %946 = vmatprep.subr.bf16.mxu0 0
  %947 = vmatpush1.bf16.msra.mxu0 0
  %948 = vmatprep.subr.bf16.mxu0 0
  %949 = vmatpush1.bf16.msra.mxu0 0
  %950 = vmatprep.mubr.bf16.mxu0 0
  %951 = vmatmul.mubr.bf16.gmra.mrb[0].mxu0 %v913
  %v952 = vpop.f32.mrb[0].mxu0
  %v953 = vadd.f32 %v897, %v952
  %v954 = vpop.f32.mrb[0].mxu0
  %v955 = vpop.f32.mrb[0].mxu0
  %v956 = vadd.f32 %v897, %v955
  %v957 = vpop.f32.mrb[0].mxu0
  %958 = vmatprep.mubr.bf16.mxu0 0
  %959 = vmatmul.mubr.bf16.gmra.mrb[0].mxu0 %v916
  %v960 = vpop.f32.mrb[0].mxu0
  %v961 = vadd.f32 %v897, %v960
  %v962 = vpop.f32.mrb[0].mxu0
  %v963 = vpop.f32.mrb[0].mxu0
  %v964 = vpop.f32.mrb[0].mxu0
  %965 = vdwg.mxu0
  %v966 = vmul.f32 %v953, 0.01
  %v967 = vmul.f32 %v956, 0.01
  %v968 = vmul.f32 %v961, 0.01
  %v969 = vmax.f32 %v953, %v966
  %v970 = vmax.f32 %v956, %v967
  %v971 = vmax.f32 %v961, %v968
  %v972 = vpack.c.bf16 %v970, %v969
  %v973 = vpack.c.bf16 %v971, %v971
  %v974 = vld [vmem:[%s7] sm:$0xf]
  %v975 = vld [vmem:[%s7 + $0x4] sm:$0xf]
  %v976 = vld [vmem:[%s7 + $0x8] sm:$0xf]
  %v977 = vld [vmem:[%s7 + $0xc] sm:$0xf]
  %v978 = vld [vmem:[%s8] sm:$0x1]
  %v980 = vlaneseq
  %v981 = vshrl.u32 %v980, 7
  %v982 = vsub.s32 0, %v981
  %v983 = vrot.slane %v978, %v982
  %v989 = vunpack.c.l.b16 %v974
  %v990 = vunpack.c.l.b16 %v975
  %v991 = vunpack.c.l.b16 %v976
  %v992 = vunpack.c.l.b16 %v977
  %v993 = vpack.c.b16 %v990, %v989
  %v994 = vpack.c.b16 %v992, %v991
  %v998 = vsel %vm911, %v972, 0
  %v1001 = vsel %vm911, %v973, 0
  %1003 = vmatprep.subr.bf16.mxu0 0
  %1004 = vmatpush1.bf16.msra.mxu0 %v993
  %1005 = vmatprep.subr.bf16.mxu0 0
  %1006 = vmatpush1.bf16.msra.mxu0 %v994
  %1007 = vmatprep.subr.bf16.mxu0 0
  %1008 = vmatpush1.bf16.msra.mxu0 0
  %1009 = vmatprep.subr.bf16.mxu0 0
  %1010 = vmatpush1.bf16.msra.mxu0 0
  %1011 = vmatprep.subr.bf16.mxu0 0
  %1012 = vmatpush1.bf16.msra.mxu0 0
  %1013 = vmatprep.subr.bf16.mxu0 0
  %1014 = vmatpush1.bf16.msra.mxu0 0
  %1015 = vmatprep.subr.bf16.mxu0 0
  %1016 = vmatpush1.bf16.msra.mxu0 0
  %1017 = vmatprep.subr.bf16.mxu0 0
  %1018 = vmatpush1.bf16.msra.mxu0 0
  %1019 = vmatprep.subr.bf16.mxu0 0
  %1020 = vmatpush1.bf16.msra.mxu0 0
  %1021 = vmatprep.subr.bf16.mxu0 0
  %1022 = vmatpush1.bf16.msra.mxu0 0
  %1023 = vmatprep.subr.bf16.mxu0 0
  %1024 = vmatpush1.bf16.msra.mxu0 0
  %1025 = vmatprep.subr.bf16.mxu0 0
  %1026 = vmatpush1.bf16.msra.mxu0 0
  %1027 = vmatprep.subr.bf16.mxu0 0
  %1028 = vmatpush1.bf16.msra.mxu0 0
  %1029 = vmatprep.subr.bf16.mxu0 0
  %1030 = vmatpush1.bf16.msra.mxu0 0
  %1031 = vmatprep.subr.bf16.mxu0 0
  %1032 = vmatpush1.bf16.msra.mxu0 0
  %1033 = vmatprep.subr.bf16.mxu0 0
  %1034 = vmatpush1.bf16.msra.mxu0 0
  %1035 = vmatprep.mubr.bf16.mxu0 0
  %1036 = vmatmul.mubr.bf16.gmra.mrb[0].mxu0 %v998
  %v1037 = vpop.f32.mrb[0].mxu0
  %v1038 = vadd.f32 %v983, %v1037
  %v1039 = vpop.f32.mrb[0].mxu0
  %v1040 = vpop.f32.mrb[0].mxu0
  %v1041 = vadd.f32 %v983, %v1040
  %v1042 = vpop.f32.mrb[0].mxu0
  %1043 = vmatprep.mubr.bf16.mxu0 0
  %1044 = vmatmul.mubr.bf16.gmra.mrb[0].mxu0 %v1001
  %v1045 = vpop.f32.mrb[0].mxu0
  %v1046 = vadd.f32 %v983, %v1045
  %v1047 = vpop.f32.mrb[0].mxu0
  %v1048 = vpop.f32.mrb[0].mxu0
  %v1049 = vpop.f32.mrb[0].mxu0
  %1050 = vdwg.mxu0
  %vm1051 = vcmask 64512
  %1052 = vst.msk [vmem:[%s9] sm:$0xff] %vm1051, %v1038
  %1053 = vst.msk [vmem:[%s9 + $0x8] sm:$0xff] %vm1051, %v1041
  %vm1054 = vcmask 60416
  %1055 = vst.msk [vmem:[%s9 + $0x10] sm:$0xf] %vm1054, %v1046
  // Predicated region
  $region38: #{tpu_custom_call.1} parent=0 // pred_check
    _
  $region39: #{tpu_custom_call.1} parent=0 // pred_check_branch
    %1057 = sbr.rel (0) target = $region41
  $region40: #{tpu_custom_call.1} parent=0 // pred_region
    _
  $region41: #{tpu_custom_call.1} parent=0 // pred_fallthru
    _
  // Predicated region
  $region42: #{tpu_custom_call.1} parent=0 // pred_check
    _
  $region43: #{tpu_custom_call.1} parent=0 // pred_check_branch
    %1059 = sbr.rel (0) target = $region45
  $region44: #{tpu_custom_call.1} parent=0 // pred_region
    _
  $region45: #{tpu_custom_call.1} parent=0 // pred_fallthru
    _

</llo_original>
